<compile_context>
chip_gen: v7x
topology: tpu7x:2x2x1
jax: 0.10.0
libtpu: 0.0.40
codegen_flags: <defaults>
</compile_context>

<pallas_src>
import functools

import jax
import jax.numpy as jnp
from jax.experimental import pallas as pl
from jax.experimental.pallas import tpu as pltpu

_LANE = 128       # lane width (last-dim alignment)
_SUBLANE = 8      # f32 sublane count (second-to-last-dim alignment)
_NEG_INF = -1e30  # "minus infinity" bias for padded softmax columns


def _round_up(x, m):
    return (x + m - 1) // m * m


def lstm_seq_kernel(x_ref, hx0_ref, cx0_ref, w_x_ref, w_h_ref, b_ref,
                    w_fc_ref, b_fc_ref,
                    pred_ref, hx_out_ref, cx_out_ref,
                    h_scr, c_scr):
    """One time step of the fused sequence kernel (grid axis 0 = time).

    x_ref:    (1, BP, IP)   x_t, zero-padded, streamed per step
    hx0_ref:  (BP, HP)      initial hidden state, zero-padded, resident
    cx0_ref:  (BP, HP)      initial cell state, zero-padded, resident
    w_x_ref:  (IP, 4*HP)    W_ih^T, gate order (i,f,o,g), per-gate padded
    w_h_ref:  (HP, 4*HP)    W_hh^T, gate order (i,f,o,g), per-gate padded
    b_ref:    (1, 4*HP)     b_ih + b_hh, per-gate padded
    w_fc_ref: (HP, OP)      fc weight (transposed), zero-padded
    b_fc_ref: (1, OP)       fc bias, padded columns = -1e30
    pred_ref: (1, BP, OP)   per-step log-softmax output
    hx_out_ref / cx_out_ref: (BP, HP) final state (written at last step)
    h_scr / c_scr: (BP, HP) f32 VMEM scratch carrying the recurrent state
    """
    t = pl.program_id(0)
    hp = h_scr.shape[-1]

    @pl.when(t == 0)
    def _():
        h_scr[...] = hx0_ref[...].astype(jnp.float32)
        c_scr[...] = cx0_ref[...].astype(jnp.float32)

    # Gate projection: two MXU dots (no per-step [x, hx] concat), f32 accumulate.
    wdt = w_x_ref.dtype
    gates = (jnp.dot(x_ref[0].astype(wdt), w_x_ref[...],
                     preferred_element_type=jnp.float32)
             + jnp.dot(h_scr[...].astype(wdt), w_h_ref[...],
                       preferred_element_type=jnp.float32)
             + b_ref[...].astype(jnp.float32))

    # Gate order is (i, f, o, g): one sigmoid over a contiguous 3*HP slab,
    # one tanh over the last HP block.  All slices start on 128-lane bounds.
    sig = jax.nn.sigmoid(gates[:, :3 * hp])
    i_g = sig[:, 0 * hp:1 * hp]
    f_g = sig[:, 1 * hp:2 * hp]
    o_g = sig[:, 2 * hp:3 * hp]
    g_g = jnp.tanh(gates[:, 3 * hp:4 * hp])

    c_new = f_g * c_scr[...] + i_g * g_g
    h_new = o_g * jnp.tanh(c_new)
    h_scr[...] = h_new
    c_scr[...] = c_new

    # fc + log-softmax over dim=1.  Padded logit columns carry a -1e30 bias,
    # so exp(shifted) == 0 there and the normalizer only sees real columns.
    logits = jnp.dot(h_new.astype(wdt), w_fc_ref[...],
                     preferred_element_type=jnp.float32) + b_fc_ref[...]
    m = jnp.max(logits, axis=1, keepdims=True)
    shifted = logits - m
    lse = jnp.log(jnp.sum(jnp.exp(shifted), axis=1, keepdims=True))
    pred_ref[0] = (shifted - lse).astype(pred_ref.dtype)

    @pl.when(t == pl.num_programs(0) - 1)
    def _():
        hx_out_ref[...] = h_new.astype(hx_out_ref.dtype)
        cx_out_ref[...] = c_new.astype(cx_out_ref.dtype)


def prepare_params(w_ih, w_hh, b_ih, b_hh, w_fc, b_fc,
                   param_dtype=jnp.float32):
    """One-time parameter preparation (hoisted out of the step/sequence path).

    w_ih: (4H, I), w_hh: (4H, H), b_ih/b_hh: (4H,)  [torch gate order i,f,g,o]
    w_fc: (O, H),  b_fc: (O,)
    Returns padded, pre-transposed params in gate order (i, f, o, g).
    Use param_dtype=jnp.bfloat16 on v6e/v7x to halve weight VMEM/DMA bytes.
    """
    four_h, in_size = w_ih.shape
    H = four_h // 4
    O = w_fc.shape[0]
    HP = _round_up(H, _LANE)
    OP = _round_up(O, _LANE)
    IP = _round_up(in_size, _LANE)
    order = (0, 1, 3, 2)  # torch (i,f,g,o) -> kernel (i,f,o,g)

    def gate_pad_cols(mat_t):  # (rows, 4H) -> (rows, 4*HP), reordered & padded
        blocks = []
        for g in order:
            blk = mat_t[:, g * H:(g + 1) * H]
            blocks.append(jnp.pad(blk, ((0, 0), (0, HP - H))))
        return jnp.concatenate(blocks, axis=1)

    w_x_p = jnp.pad(gate_pad_cols(w_ih.T.astype(jnp.float32)),
                    ((0, IP - in_size), (0, 0))).astype(param_dtype)   # (IP, 4*HP)
    w_h_p = jnp.pad(gate_pad_cols(w_hh.T.astype(jnp.float32)),
                    ((0, HP - H), (0, 0))).astype(param_dtype)         # (HP, 4*HP)

    b_cat = (b_ih + b_hh).astype(jnp.float32)
    b_p = jnp.concatenate(
        [jnp.pad(b_cat[g * H:(g + 1) * H], (0, HP - H)) for g in order]
    ).reshape(1, 4 * HP)                                               # (1, 4*HP)

    w_fc_p = jnp.pad(w_fc.T.astype(jnp.float32),
                     ((0, HP - H), (0, OP - O))).astype(param_dtype)   # (HP, OP)
    b_fc_p = jnp.pad(b_fc.astype(jnp.float32), (0, OP - O),
                     constant_values=_NEG_INF).reshape(1, OP)          # (1, OP)
    return (w_x_p, w_h_p, b_p, w_fc_p, b_fc_p)


@functools.partial(jax.jit, static_argnames=("hidden_size", "output_size"))
def lstm_sequence_forward(x_seq, hx, cx, params, *, hidden_size, output_size):
    """Sequence-fused forward: applies the module's forward() T times.

    x_seq: (T, B, I);  hx, cx: (B, H);  params: output of prepare_params().
    Returns (pred_seq (T, B, O), hx_T (B, H), cx_T (B, H)).
    Weights and state stay VMEM-resident across all T steps; x_t / pred_t are
    streamed through per-step BlockSpecs.
    """
    w_x_p, w_h_p, b_p, w_fc_p, b_fc_p = params
    T, B, in_size = x_seq.shape
    H, O = hidden_size, output_size
    IP = w_x_p.shape[0]
    HP = w_h_p.shape[0]
    OP = w_fc_p.shape[1]
    BP = _round_up(B, _SUBLANE)

    # Once-per-sequence padding (not per step).
    x_p = jnp.pad(x_seq.astype(jnp.float32),
                  ((0, 0), (0, BP - B), (0, IP - in_size)))
    hx_p = jnp.pad(hx.astype(jnp.float32), ((0, BP - B), (0, HP - H)))
    cx_p = jnp.pad(cx.astype(jnp.float32), ((0, BP - B), (0, HP - H)))

    flops = T * (2 * BP * IP * 4 * HP + 2 * BP * HP * 4 * HP + 2 * BP * HP * OP)
    transc = T * (5 * BP * HP + BP * OP)
    bytes_acc = (x_p.size * 4 + T * BP * OP * 4 + 4 * BP * HP * 4
                 + w_x_p.size * w_x_p.dtype.itemsize
                 + w_h_p.size * w_h_p.dtype.itemsize
                 + w_fc_p.size * w_fc_p.dtype.itemsize
                 + (b_p.size + b_fc_p.size) * 4)

    pred_p, hx_out, cx_out = pl.pallas_call(
        lstm_seq_kernel,
        out_shape=(
            jax.ShapeDtypeStruct((T, BP, OP), jnp.float32),
            jax.ShapeDtypeStruct((BP, HP), jnp.float32),
            jax.ShapeDtypeStruct((BP, HP), jnp.float32),
        ),
        grid_spec=pltpu.PrefetchScalarGridSpec(
            num_scalar_prefetch=0,
            grid=(T,),
            in_specs=[
                pl.BlockSpec((1, BP, IP), lambda t: (t, 0, 0)),   # x_t streamed
                pl.BlockSpec((BP, HP), lambda t: (0, 0)),         # hx0 resident
                pl.BlockSpec((BP, HP), lambda t: (0, 0)),         # cx0 resident
                pl.BlockSpec((IP, 4 * HP), lambda t: (0, 0)),     # W_x resident
                pl.BlockSpec((HP, 4 * HP), lambda t: (0, 0)),     # W_h resident
                pl.BlockSpec((1, 4 * HP), lambda t: (0, 0)),      # b   resident
                pl.BlockSpec((HP, OP), lambda t: (0, 0)),         # W_fc resident
                pl.BlockSpec((1, OP), lambda t: (0, 0)),          # b_fc resident
            ],
            out_specs=(
                pl.BlockSpec((1, BP, OP), lambda t: (t, 0, 0)),   # pred_t streamed
                pl.BlockSpec((BP, HP), lambda t: (0, 0)),         # hx_T
                pl.BlockSpec((BP, HP), lambda t: (0, 0)),         # cx_T
            ),
            scratch_shapes=[
                pltpu.VMEM((BP, HP), jnp.float32),                # h carry
                pltpu.VMEM((BP, HP), jnp.float32),                # c carry
            ],
        ),
        compiler_params=pltpu.CompilerParams(
            dimension_semantics=("arbitrary",)),                  # time recurrence
        cost_estimate=pl.CostEstimate(
            flops=flops, transcendentals=transc, bytes_accessed=bytes_acc),
    )(x_p, hx_p, cx_p, w_x_p, w_h_p, b_p, w_fc_p, b_fc_p)

    # Strip padding once for the whole sequence.
    return pred_p[:, :B, :O], hx_out[:B, :H], cx_out[:B, :H]


def lstm_forward(x, hx, cx, params, *, hidden_size, output_size):
    """Single-step forward matching LSTM.forward(input, hx, cx) -> (pred, hx, cx)."""
    pred_seq, hx_new, cx_new = lstm_sequence_forward(
        x[None], hx, cx, params, hidden_size=hidden_size, output_size=output_size)
    return pred_seq[0], hx_new, cx_new


def reference_forward(x, hx, cx, w_ih, w_hh, b_ih, b_hh, w_fc, b_fc):
    gates = x @ w_ih.T + b_ih + hx @ w_hh.T + b_hh
    H = hx.shape[-1]
    i_g = jax.nn.sigmoid(gates[:, 0 * H:1 * H])
    f_g = jax.nn.sigmoid(gates[:, 1 * H:2 * H])
    g_g = jnp.tanh(gates[:, 2 * H:3 * H])
    o_g = jax.nn.sigmoid(gates[:, 3 * H:4 * H])
    cx_new = f_g * cx + i_g * g_g
    hx_new = o_g * jnp.tanh(cx_new)
    logits = hx_new @ w_fc.T + b_fc
    pred = jax.nn.log_softmax(logits, axis=1)
    return pred, hx_new, cx_new


if __name__ == "__main__":
    # Small shapes consistent with the module: char-RNN style cell.
    B, I, H, O, T = 2, 16, 32, 8, 8
    key = jax.random.PRNGKey(0)
    keys = jax.random.split(key, 9)

    x_seq = jax.random.normal(keys[0], (T, B, I), dtype=jnp.float32)
    hx0 = jax.random.normal(keys[1], (B, H), dtype=jnp.float32)
    cx0 = jax.random.normal(keys[2], (B, H), dtype=jnp.float32)

    s = 1.0 / jnp.sqrt(H)
    w_ih = jax.random.uniform(keys[3], (4 * H, I), minval=-s, maxval=s)
    w_hh = jax.random.uniform(keys[4], (4 * H, H), minval=-s, maxval=s)
    b_ih = jax.random.uniform(keys[5], (4 * H,), minval=-s, maxval=s)
    b_hh = jax.random.uniform(keys[6], (4 * H,), minval=-s, maxval=s)
    w_fc = jax.random.uniform(keys[7], (O, H), minval=-s, maxval=s)
    b_fc = jax.random.uniform(keys[8], (O,), minval=-s, maxval=s)

    # One-time parameter glue.
    params = jax.block_until_ready(
        prepare_params(w_ih, w_hh, b_ih, b_hh, w_fc, b_fc))

    # --- Single step (exact module semantics: forward(input, hx, cx)). ---
    pred1, hx1, cx1 = jax.block_until_ready(
        lstm_forward(x_seq[0], hx0, cx0, params, hidden_size=H, output_size=O))
    pred1_r, hx1_r, cx1_r = reference_forward(
        x_seq[0], hx0, cx0, w_ih, w_hh, b_ih, b_hh, w_fc, b_fc)
    assert jnp.allclose(pred1, pred1_r, atol=1e-5), "single-step pred mismatch"
    assert jnp.allclose(hx1, hx1_r, atol=1e-5), "single-step hx mismatch"
    assert jnp.allclose(cx1, cx1_r, atol=1e-5), "single-step cx mismatch"

    # --- Sequence-fused path: T steps in one pallas_call. ---
    pred_seq, hx_T, cx_T = jax.block_until_ready(
        lstm_sequence_forward(x_seq, hx0, cx0, params,
                              hidden_size=H, output_size=O))

    hx_r, cx_r = hx0, cx0
    preds_r = []
    for t in range(T):
        p_r, hx_r, cx_r = reference_forward(
            x_seq[t], hx_r, cx_r, w_ih, w_hh, b_ih, b_hh, w_fc, b_fc)
        preds_r.append(p_r)
    preds_r = jnp.stack(preds_r)

    assert jnp.allclose(pred_seq, preds_r, atol=1e-4), "sequence pred mismatch"
    assert jnp.allclose(hx_T, hx_r, atol=1e-4), "sequence hx mismatch"
    assert jnp.allclose(cx_T, cx_r, atol=1e-4), "sequence cx mismatch"

    print("KERNEL_OK")
</pallas_src>

<mosaic_0001>
module attributes {stable_mosaic.version = 11 : i64} {
  func.func @lstm_seq_kernel(%arg0: i32, %arg1: memref<1x8x128xf32, #tpu.memory_space<vmem>>, %arg2: memref<8x128xf32, #tpu.memory_space<vmem>>, %arg3: memref<8x128xf32, #tpu.memory_space<vmem>>, %arg4: memref<128x512xf32, #tpu.memory_space<vmem>>, %arg5: memref<128x512xf32, #tpu.memory_space<vmem>>, %arg6: memref<1x512xf32, #tpu.memory_space<vmem>>, %arg7: memref<128x128xf32, #tpu.memory_space<vmem>>, %arg8: memref<1x128xf32, #tpu.memory_space<vmem>>, %arg9: memref<1x8x128xf32, #tpu.memory_space<vmem>>, %arg10: memref<8x128xf32, #tpu.memory_space<vmem>>, %arg11: memref<8x128xf32, #tpu.memory_space<vmem>>, %arg12: memref<8x128xf32, #tpu.memory_space<vmem>>, %arg13: memref<8x128xf32, #tpu.memory_space<vmem>>) attributes {dimension_semantics = [#tpu.dimension_semantics<arbitrary>], iteration_bounds = array<i64: 1>, scalar_prefetch = 0 : i64, scratch_operands = 2 : i64, tpu.core_type = #tpu.core_type<tc>, window_params = [{transform_indices = @transform_0, window_bounds = array<i64: 1, 8, 128>}, {pipeline_mode = #tpu.pipeline_mode<synchronous>, transform_indices = @transform_1, window_bounds = array<i64: 8, 128>}, {pipeline_mode = #tpu.pipeline_mode<synchronous>, transform_indices = @transform_2, window_bounds = array<i64: 8, 128>}, {pipeline_mode = #tpu.pipeline_mode<synchronous>, transform_indices = @transform_3, window_bounds = array<i64: 128, 512>}, {pipeline_mode = #tpu.pipeline_mode<synchronous>, transform_indices = @transform_4, window_bounds = array<i64: 128, 512>}, {pipeline_mode = #tpu.pipeline_mode<synchronous>, transform_indices = @transform_5, window_bounds = array<i64: 1, 512>}, {pipeline_mode = #tpu.pipeline_mode<synchronous>, transform_indices = @transform_6, window_bounds = array<i64: 128, 128>}, {pipeline_mode = #tpu.pipeline_mode<synchronous>, transform_indices = @transform_7, window_bounds = array<i64: 1, 128>}, {transform_indices = @transform_8, window_bounds = array<i64: 1, 8, 128>}, {pipeline_mode = #tpu.pipeline_mode<synchronous>, transform_indices = @transform_9, window_bounds = array<i64: 8, 128>}, {pipeline_mode = #tpu.pipeline_mode<synchronous>, transform_indices = @transform_10, window_bounds = array<i64: 8, 128>}]} {
    %c0_i32 = arith.constant 0 : i32
    %0 = arith.cmpi eq, %arg0, %c0_i32 : i32
    %1 = arith.extui %0 : i1 to i32
    %c0_i32_0 = arith.constant 0 : i32
    %2 = arith.cmpi ne, %1, %c0_i32_0 : i32
    scf.if %2 {
      %c0_31 = arith.constant 0 : index
      %c0_32 = arith.constant 0 : index
      %54 = vector.load %arg2[%c0_31, %c0_32] : memref<8x128xf32, #tpu.memory_space<vmem>>, vector<8x128xf32>
      %c0_33 = arith.constant 0 : index
      %c0_34 = arith.constant 0 : index
      %55 = vector.load %arg12[%c0_33, %c0_34] : memref<8x128xf32, #tpu.memory_space<vmem>>, vector<8x128xf32>
      tpu.vector_store %arg12[%c0_33, %c0_34], %54 {strides = array<i32>} : memref<8x128xf32, #tpu.memory_space<vmem>>, vector<8x128xf32>,
      %c0_35 = arith.constant 0 : index
      %c0_36 = arith.constant 0 : index
      %56 = vector.load %arg3[%c0_35, %c0_36] : memref<8x128xf32, #tpu.memory_space<vmem>>, vector<8x128xf32>
      %c0_37 = arith.constant 0 : index
      %c0_38 = arith.constant 0 : index
      %57 = vector.load %arg13[%c0_37, %c0_38] : memref<8x128xf32, #tpu.memory_space<vmem>>, vector<8x128xf32>
      tpu.vector_store %arg13[%c0_37, %c0_38], %56 {strides = array<i32>} : memref<8x128xf32, #tpu.memory_space<vmem>>, vector<8x128xf32>,
    } else {
    }
    %c0 = arith.constant 0 : index
    %c0_1 = arith.constant 0 : index
    %c0_2 = arith.constant 0 : index
    %3 = vector.load %arg1[%c0, %c0_1, %c0_2] : memref<1x8x128xf32, #tpu.memory_space<vmem>>, vector<1x8x128xf32>
    %4 = vector.shape_cast %3 : vector<1x8x128xf32> to vector<8x128xf32>
    %c0_3 = arith.constant 0 : index
    %c0_4 = arith.constant 0 : index
    %5 = vector.load %arg4[%c0_3, %c0_4] : memref<128x512xf32, #tpu.memory_space<vmem>>, vector<128x512xf32>
    %cst = arith.constant dense<0.000000e+00> : vector<8x512xf32>
    %6 = tpu.matmul %4, %5, %cst {dimension_numbers = #tpu.dot_dimension_numbers<[1], [0], [0], [1], [0, 0, 1, 1], [], []>} : vector<8x128xf32>, vector<128x512xf32>, vector<8x512xf32> -> vector<8x512xf32>
    %c0_5 = arith.constant 0 : index
    %c0_6 = arith.constant 0 : index
    %7 = vector.load %arg12[%c0_5, %c0_6] : memref<8x128xf32, #tpu.memory_space<vmem>>, vector<8x128xf32>
    %c0_7 = arith.constant 0 : index
    %c0_8 = arith.constant 0 : index
    %8 = vector.load %arg5[%c0_7, %c0_8] : memref<128x512xf32, #tpu.memory_space<vmem>>, vector<128x512xf32>
    %cst_9 = arith.constant dense<0.000000e+00> : vector<8x512xf32>
    %9 = tpu.matmul %7, %8, %cst_9 {dimension_numbers = #tpu.dot_dimension_numbers<[1], [0], [0], [1], [0, 0, 1, 1], [], []>} : vector<8x128xf32>, vector<128x512xf32>, vector<8x512xf32> -> vector<8x512xf32>
    %10 = arith.addf %6, %9 : vector<8x512xf32>
    %c0_10 = arith.constant 0 : index
    %c0_11 = arith.constant 0 : index
    %11 = vector.load %arg6[%c0_10, %c0_11] : memref<1x512xf32, #tpu.memory_space<vmem>>, vector<1x512xf32>
    %12 = vector.broadcast %11 : vector<1x512xf32> to vector<8x512xf32>
    %13 = arith.addf %10, %12 : vector<8x512xf32>
    %14 = vector.extract_strided_slice %13 {offsets = [0, 0], sizes = [8, 384], strides = [1, 1]} : vector<8x512xf32> to vector<8x384xf32>
    %15 = arith.negf %14 : vector<8x384xf32>
    %16 = math.exp %15 : vector<8x384xf32>
    %cst_12 = arith.constant 1.000000e+00 : f32
    %17 = vector.broadcast %cst_12 : f32 to vector<8x384xf32>
    %18 = arith.addf %17, %16 : vector<8x384xf32>
    %19 = arith.divf %17, %18 : vector<8x384xf32>
    %20 = vector.extract_strided_slice %19 {offsets = [0, 0], sizes = [8, 128], strides = [1, 1]} : vector<8x384xf32> to vector<8x128xf32>
    %21 = vector.extract_strided_slice %19 {offsets = [0, 128], sizes = [8, 128], strides = [1, 1]} : vector<8x384xf32> to vector<8x128xf32>
    %22 = vector.extract_strided_slice %19 {offsets = [0, 256], sizes = [8, 128], strides = [1, 1]} : vector<8x384xf32> to vector<8x128xf32>
    %23 = vector.extract_strided_slice %13 {offsets = [0, 384], sizes = [8, 128], strides = [1, 1]} : vector<8x512xf32> to vector<8x128xf32>
    %24 = math.tanh %23 : vector<8x128xf32>
    %c0_13 = arith.constant 0 : index
    %c0_14 = arith.constant 0 : index
    %25 = vector.load %arg13[%c0_13, %c0_14] : memref<8x128xf32, #tpu.memory_space<vmem>>, vector<8x128xf32>
    %26 = arith.mulf %21, %25 : vector<8x128xf32>
    %27 = arith.mulf %20, %24 : vector<8x128xf32>
    %28 = arith.addf %26, %27 : vector<8x128xf32>
    %29 = math.tanh %28 : vector<8x128xf32>
    %30 = arith.mulf %22, %29 : vector<8x128xf32>
    %c0_15 = arith.constant 0 : index
    %c0_16 = arith.constant 0 : index
    %31 = vector.load %arg12[%c0_15, %c0_16] : memref<8x128xf32, #tpu.memory_space<vmem>>, vector<8x128xf32>
    tpu.vector_store %arg12[%c0_15, %c0_16], %30 {strides = array<i32>} : memref<8x128xf32, #tpu.memory_space<vmem>>, vector<8x128xf32>,
    %c0_17 = arith.constant 0 : index
    %c0_18 = arith.constant 0 : index
    %32 = vector.load %arg13[%c0_17, %c0_18] : memref<8x128xf32, #tpu.memory_space<vmem>>, vector<8x128xf32>
    tpu.vector_store %arg13[%c0_17, %c0_18], %28 {strides = array<i32>} : memref<8x128xf32, #tpu.memory_space<vmem>>, vector<8x128xf32>,
    %c0_19 = arith.constant 0 : index
    %c0_20 = arith.constant 0 : index
    %33 = vector.load %arg7[%c0_19, %c0_20] : memref<128x128xf32, #tpu.memory_space<vmem>>, vector<128x128xf32>
    %cst_21 = arith.constant dense<0.000000e+00> : vector<8x128xf32>
    %34 = tpu.matmul %30, %33, %cst_21 {dimension_numbers = #tpu.dot_dimension_numbers<[1], [0], [0], [1], [0, 0, 1, 1], [], []>} : vector<8x128xf32>, vector<128x128xf32>, vector<8x128xf32> -> vector<8x128xf32>
    %c0_22 = arith.constant 0 : index
    %c0_23 = arith.constant 0 : index
    %35 = vector.load %arg8[%c0_22, %c0_23] : memref<1x128xf32, #tpu.memory_space<vmem>>, vector<1x128xf32>
    %36 = vector.broadcast %35 : vector<1x128xf32> to vector<8x128xf32>
    %37 = arith.addf %34, %36 : vector<8x128xf32>
    %cst_24 = arith.constant dense<0xFF800000> : vector<8xf32>
    %38 = vector.multi_reduction <maximumf>, %37, %cst_24 [1] : vector<8x128xf32> to vector<8xf32>
    %39 = vector.shape_cast %38 : vector<8xf32> to vector<8x1xf32>
    %40 = vector.broadcast %39 : vector<8x1xf32> to vector<8x128xf32>
    %41 = arith.subf %37, %40 : vector<8x128xf32>
    %42 = math.exp %41 : vector<8x128xf32>
    %cst_25 = arith.constant dense<0.000000e+00> : vector<8xf32>
    %43 = vector.multi_reduction <add>, %42, %cst_25 [1] : vector<8x128xf32> to vector<8xf32>
    %44 = vector.shape_cast %43 : vector<8xf32> to vector<8x1xf32>
    %45 = math.log %44 : vector<8x1xf32>
    %46 = vector.broadcast %45 : vector<8x1xf32> to vector<8x128xf32>
    %47 = arith.subf %41, %46 : vector<8x128xf32>
    %c0_26 = arith.constant 0 : index
    %c0_27 = arith.constant 0 : index
    %c0_28 = arith.constant 0 : index
    %48 = vector.load %arg9[%c0_26, %c0_27, %c0_28] : memref<1x8x128xf32, #tpu.memory_space<vmem>>, vector<1x8x128xf32>
    %49 = vector.shape_cast %48 : vector<1x8x128xf32> to vector<8x128xf32>
    %50 = vector.shape_cast %47 : vector<8x128xf32> to vector<1x8x128xf32>
    tpu.vector_store %arg9[%c0_26, %c0_27, %c0_28], %50 {strides = array<i32>} : memref<1x8x128xf32, #tpu.memory_space<vmem>>, vector<1x8x128xf32>,
    %c0_i32_29 = arith.constant 0 : i32
    %51 = arith.cmpi eq, %arg0, %c0_i32_29 : i32
    %52 = arith.extui %51 : i1 to i32
    %c0_i32_30 = arith.constant 0 : i32
    %53 = arith.cmpi ne, %52, %c0_i32_30 : i32
    scf.if %53 {
      %c0_31 = arith.constant 0 : index
      %c0_32 = arith.constant 0 : index
      %54 = vector.load %arg10[%c0_31, %c0_32] : memref<8x128xf32, #tpu.memory_space<vmem>>, vector<8x128xf32>
      tpu.vector_store %arg10[%c0_31, %c0_32], %30 {strides = array<i32>} : memref<8x128xf32, #tpu.memory_space<vmem>>, vector<8x128xf32>,
      %c0_33 = arith.constant 0 : index
      %c0_34 = arith.constant 0 : index
      %55 = vector.load %arg11[%c0_33, %c0_34] : memref<8x128xf32, #tpu.memory_space<vmem>>, vector<8x128xf32>
      tpu.vector_store %arg11[%c0_33, %c0_34], %28 {strides = array<i32>} : memref<8x128xf32, #tpu.memory_space<vmem>>, vector<8x128xf32>,
    } else {
    }
    return
  }
  func.func @transform_0(%arg0: i32) -> (i32, i32, i32) {
    %c0_i32 = arith.constant 0 : i32
    %c0_i32_0 = arith.constant 0 : i32
    %c0_i32_1 = arith.constant 0 : i32
    return %arg0, %c0_i32, %c0_i32_0 : i32, i32, i32
  }
  func.func @transform_1(%arg0: i32) -> (i32, i32) {
    %c0_i32 = arith.constant 0 : i32
    %c0_i32_0 = arith.constant 0 : i32
    %c0_i32_1 = arith.constant 0 : i32
    return %c0_i32, %c0_i32_0 : i32, i32
  }
  func.func @transform_2(%arg0: i32) -> (i32, i32) {
    %c0_i32 = arith.constant 0 : i32
    %c0_i32_0 = arith.constant 0 : i32
    %c0_i32_1 = arith.constant 0 : i32
    return %c0_i32, %c0_i32_0 : i32, i32
  }
  func.func @transform_3(%arg0: i32) -> (i32, i32) {
    %c0_i32 = arith.constant 0 : i32
    %c0_i32_0 = arith.constant 0 : i32
    %c0_i32_1 = arith.constant 0 : i32
    return %c0_i32, %c0_i32_0 : i32, i32
  }
  func.func @transform_4(%arg0: i32) -> (i32, i32) {
    %c0_i32 = arith.constant 0 : i32
    %c0_i32_0 = arith.constant 0 : i32
    %c0_i32_1 = arith.constant 0 : i32
    return %c0_i32, %c0_i32_0 : i32, i32
  }
  func.func @transform_5(%arg0: i32) -> (i32, i32) {
    %c0_i32 = arith.constant 0 : i32
    %c0_i32_0 = arith.constant 0 : i32
    %c0_i32_1 = arith.constant 0 : i32
    return %c0_i32, %c0_i32_0 : i32, i32
  }
  func.func @transform_6(%arg0: i32) -> (i32, i32) {
    %c0_i32 = arith.constant 0 : i32
    %c0_i32_0 = arith.constant 0 : i32
    %c0_i32_1 = arith.constant 0 : i32
    return %c0_i32, %c0_i32_0 : i32, i32
  }
  func.func @transform_7(%arg0: i32) -> (i32, i32) {
    %c0_i32 = arith.constant 0 : i32
    %c0_i32_0 = arith.constant 0 : i32
    %c0_i32_1 = arith.constant 0 : i32
    return %c0_i32, %c0_i32_0 : i32, i32
  }
  func.func @transform_8(%arg0: i32) -> (i32, i32, i32) {
    %c0_i32 = arith.constant 0 : i32
    %c0_i32_0 = arith.constant 0 : i32
    %c0_i32_1 = arith.constant 0 : i32
    return %arg0, %c0_i32, %c0_i32_0 : i32, i32, i32
  }
  func.func @transform_9(%arg0: i32) -> (i32, i32) {
    %c0_i32 = arith.constant 0 : i32
    %c0_i32_0 = arith.constant 0 : i32
    %c0_i32_1 = arith.constant 0 : i32
    return %c0_i32, %c0_i32_0 : i32, i32
  }
  func.func @transform_10(%arg0: i32) -> (i32, i32) {
    %c0_i32 = arith.constant 0 : i32
    %c0_i32_0 = arith.constant 0 : i32
    %c0_i32_1 = arith.constant 0 : i32
    return %c0_i32, %c0_i32_0 : i32, i32
  }
}

</mosaic_0001>

<llo_original>
// kernel: lstm_sequence_forward.1
$region0: #{lstm_sequence_forward.1}
  #allocation0 [shape = 'u32[]', space=smem, size = 0x4, offset = 0x4, fixed_abs, tag = 'smem constant byte address 0x4 - core index']
  #allocation1 [shape = 'u32[144,128]{1,0:T(1,128)}', space=vmem, size = 0x12000, scoped, tag = 'internal scratch']
  #allocation2 [shape = 'f32[8,128]{1,0:T(8,128)}', space=vmem, size = 0x1000, scoped, tag = 'scratch operand']
  #allocation3 [shape = 'f32[8,128]{1,0:T(8,128)}', space=vmem, size = 0x1000, scoped, tag = 'scratch operand']
  %s0 = inlined_call_operand.vmem [shape: f32[1,8,128], index: 0, kind: input, shape index: {}]
  %s1 = inlined_call_operand.vmem [shape: f32[8,128], index: 1, kind: input, shape index: {}]
  %s2 = inlined_call_operand.vmem [shape: f32[8,128], index: 2, kind: input, shape index: {}]
  %s3 = inlined_call_operand.hbm [shape: f32[128,512], index: 3, kind: input, shape index: {}]
  %s4 = inlined_call_operand.hbm [shape: f32[128,512], index: 4, kind: input, shape index: {}]
  %s5 = inlined_call_operand.vmem [shape: f32[1,512], index: 5, kind: input, shape index: {}]
  %s6 = inlined_call_operand.hbm [shape: f32[128,128], index: 6, kind: input, shape index: {}]
  %s7 = inlined_call_operand.vmem [shape: f32[1,128], index: 7, kind: input, shape index: {}]
  %s8 = inlined_call_operand.vmem [shape: f32[1,8,128], index: 8, kind: output, shape index: {0}]
  %s9 = inlined_call_operand.vmem [shape: f32[8,128], index: 9, kind: output, shape index: {1}]
  %s10 = inlined_call_operand.vmem [shape: f32[8,128], index: 10, kind: output, shape index: {2}]
  %11 = xla_tuple %s8, %s9, %s10
  %s12 = sld [smem:[#allocation0]]
  $region78: #{lstm_sequence_forward.1} parent=0
    _
  %s14 = ssub.s32 1, %s12
  %s15 = scalar_select 0, %s14, %s12
  $region1: #{lstm_sequence_forward.1} parent=0
    #allocation4 [shape = 'u8[262144]{0}', space=vmem, size = 0x40000, scoped, tag = 'input window, operand 3, single buffered']
    #allocation5 [shape = 's32[1]{0}', space=sflag, size = 0x4, scoped, tag = 'scoped memory for lstm_sequence_forward.1']
    #allocation6 [shape = 'u8[262144]{0}', space=vmem, size = 0x40000, scoped, tag = 'input window, operand 4, single buffered']
    #allocation7 [shape = 's32[1]{0}', space=sflag, size = 0x4, scoped, tag = 'scoped memory for lstm_sequence_forward.1']
    #allocation8 [shape = 'u8[65536]{0}', space=vmem, size = 0x10000, scoped, tag = 'input window, operand 6, single buffered']
    %16 = vsyncpa [#allocation5], 0
    %17 = vsyncpa [#allocation7], 0
    // Predicated region
    $region2: #{lstm_sequence_forward.1} parent=1 // pred_check
      _
    $region3: #{lstm_sequence_forward.1} parent=1 // pred_check_branch
      %19 = sbr.rel (0) target = $region5
    $region4: #{lstm_sequence_forward.1} parent=1 // pred_region
      _
    $region5: #{lstm_sequence_forward.1} parent=1 // pred_fallthru
      _
    // Predicated region
    $region6: #{lstm_sequence_forward.1} parent=1 // pred_check
      _
    $region7: #{lstm_sequence_forward.1} parent=1 // pred_check_branch
      %21 = sbr.rel (0) target = $region9
    $region8: #{lstm_sequence_forward.1} parent=1 // pred_region
      _
    $region9: #{lstm_sequence_forward.1} parent=1 // pred_fallthru
      _
    // Predicated region
    $region10: #{lstm_sequence_forward.1} parent=1 // pred_check
      _
    $region11: #{lstm_sequence_forward.1} parent=1 // pred_check_branch
      %23 = sbr.rel (0) target = $region13
    $region12: #{lstm_sequence_forward.1} parent=1 // pred_region
      _
    $region13: #{lstm_sequence_forward.1} parent=1 // pred_fallthru
      _
    // Predicated region
    $region14: #{lstm_sequence_forward.1} parent=1 // pred_check
      _
    $region15: #{lstm_sequence_forward.1} parent=1 // pred_check_branch
      %25 = sbr.rel (0) target = $region17
    $region16: #{lstm_sequence_forward.1} parent=1 // pred_region
      %s27 = ssub.s32 8192, 8192
      %28 = vsyncadd [#allocation5], %s27
      %s29 = sshll.u32 [#allocation4], 4
      %s30 = int_to_ptr.vmem [resolvable:$true] %s29
      %35 = dma.hbm_to_vmem [thread:$0]  %s3, 8192, %s30, [#allocation5], 512, 512, 32
    $region17: #{lstm_sequence_forward.1} parent=1 // pred_fallthru
      _
    // Predicated region
    $region18: #{lstm_sequence_forward.1} parent=1 // pred_check
      _
    $region19: #{lstm_sequence_forward.1} parent=1 // pred_check_branch
      %37 = sbr.rel (0) target = $region21
    $region20: #{lstm_sequence_forward.1} parent=1 // pred_region
      %s39 = ssub.s32 8192, 8192
      %40 = vsyncadd [#allocation7], %s39
      %s41 = sshll.u32 [#allocation6], 4
      %s42 = int_to_ptr.vmem [resolvable:$true] %s41
      %47 = dma.hbm_to_vmem [thread:$0]  %s4, 8192, %s42, [#allocation7], 512, 512, 32
    $region21: #{lstm_sequence_forward.1} parent=1 // pred_fallthru
      _
    // Predicated region
    $region22: #{lstm_sequence_forward.1} parent=1 // pred_check
      _
    $region23: #{lstm_sequence_forward.1} parent=1 // pred_check_branch
      %49 = sbr.rel (0) target = $region25
    $region24: #{lstm_sequence_forward.1} parent=1 // pred_region
      _
    $region25: #{lstm_sequence_forward.1} parent=1 // pred_fallthru
      _
    // Predicated region
    $region26: #{lstm_sequence_forward.1} parent=1 // pred_check
      _
    $region27: #{lstm_sequence_forward.1} parent=1 // pred_check_branch
      %51 = sbr.rel (0) target = $region29
    $region28: #{lstm_sequence_forward.1} parent=1 // pred_region
      %s53 = ssub.s32 2048, 2048
      %54 = vsyncadd [#allocation7], %s53
      %s55 = sshll.u32 [#allocation8], 4
      %s56 = int_to_ptr.vmem [resolvable:$true] %s55
      %61 = dma.hbm_to_vmem [thread:$0]  %s6, 2048, %s56, [#allocation7], 128, 128, 8
    $region29: #{lstm_sequence_forward.1} parent=1 // pred_fallthru
      _
    // Predicated region
    $region30: #{lstm_sequence_forward.1} parent=1 // pred_check
      _
    $region31: #{lstm_sequence_forward.1} parent=1 // pred_check_branch
      %63 = sbr.rel (0) target = $region33
    $region32: #{lstm_sequence_forward.1} parent=1 // pred_region
      _
    $region33: #{lstm_sequence_forward.1} parent=1 // pred_fallthru
      _
    // Predicated region
    $region34: #{lstm_sequence_forward.1} parent=1 // pred_check
      _
    $region35: #{lstm_sequence_forward.1} parent=1 // pred_check_branch
      %65 = sbr.rel (0) target = $region37
    $region36: #{lstm_sequence_forward.1} parent=1 // pred_region
      %66 = dma.done [#allocation5], 8192
    $region37: #{lstm_sequence_forward.1} parent=1 // pred_fallthru
      _
    // Predicated region
    $region38: #{lstm_sequence_forward.1} parent=1 // pred_check
      _
    $region39: #{lstm_sequence_forward.1} parent=1 // pred_check_branch
      %68 = sbr.rel (0) target = $region41
    $region40: #{lstm_sequence_forward.1} parent=1 // pred_region
      %69 = dma.done [#allocation7], 8192
    $region41: #{lstm_sequence_forward.1} parent=1 // pred_fallthru
      _
    // Predicated region
    $region42: #{lstm_sequence_forward.1} parent=1 // pred_check
      _
    $region43: #{lstm_sequence_forward.1} parent=1 // pred_check_branch
      %71 = sbr.rel (0) target = $region45
    $region44: #{lstm_sequence_forward.1} parent=1 // pred_region
      %72 = dma.done [#allocation7], 2048
    $region45: #{lstm_sequence_forward.1} parent=1 // pred_fallthru
      _
    %p73 = scmp.eq.s32.totalorder 0, 0
    // Predicated region
    $region46: #{lstm_sequence_forward.1} parent=1 // pred_check
      %p74 = pneg %p73
    $region47: #{lstm_sequence_forward.1} parent=1 // pred_check_branch
      %76 = sbr.rel (%p74) target = $region49
    $region48: #{lstm_sequence_forward.1} parent=1 // pred_region
      %v77 = vld [vmem:[%s1] sm:$0xff]
      %78 = vst [vmem:[#allocation2] sm:$0xff] %v77
      %v79 = vld [vmem:[%s2] sm:$0xff]
      %80 = vst [vmem:[#allocation3] sm:$0xff] %v79
    $region49: #{lstm_sequence_forward.1} parent=1 // pred_fallthru
      _
    %v81 = vld [vmem:[%s0] sm:$0xff]
    %v82 = vld [vmem:[#allocation4] sm:$0xff]
    %v83 = vld [vmem:[#allocation4 + $0x8] sm:$0xff]
    %v84 = vld [vmem:[#allocation4 + $0x10] sm:$0xff]
    %v85 = vld [vmem:[#allocation4 + $0x18] sm:$0xff]
    %v86 = vld [vmem:[#allocation4 + $0x20] sm:$0xff]
    %v87 = vld [vmem:[#allocation4 + $0x28] sm:$0xff]
    %v88 = vld [vmem:[#allocation4 + $0x30] sm:$0xff]
    %v89 = vld [vmem:[#allocation4 + $0x38] sm:$0xff]
    %v90 = vld [vmem:[#allocation4 + $0x40] sm:$0xff]
    %v91 = vld [vmem:[#allocation4 + $0x48] sm:$0xff]
    %v92 = vld [vmem:[#allocation4 + $0x50] sm:$0xff]
    %v93 = vld [vmem:[#allocation4 + $0x58] sm:$0xff]
    %v94 = vld [vmem:[#allocation4 + $0x60] sm:$0xff]
    %v95 = vld [vmem:[#allocation4 + $0x68] sm:$0xff]
    %v96 = vld [vmem:[#allocation4 + $0x70] sm:$0xff]
    %v97 = vld [vmem:[#allocation4 + $0x78] sm:$0xff]
    %v98 = vld [vmem:[#allocation4 + $0x80] sm:$0xff]
    %v99 = vld [vmem:[#allocation4 + $0x88] sm:$0xff]
    %v100 = vld [vmem:[#allocation4 + $0x90] sm:$0xff]
    %v101 = vld [vmem:[#allocation4 + $0x98] sm:$0xff]
    %v102 = vld [vmem:[#allocation4 + $0xa0] sm:$0xff]
    %v103 = vld [vmem:[#allocation4 + $0xa8] sm:$0xff]
    %v104 = vld [vmem:[#allocation4 + $0xb0] sm:$0xff]
    %v105 = vld [vmem:[#allocation4 + $0xb8] sm:$0xff]
    %v106 = vld [vmem:[#allocation4 + $0xc0] sm:$0xff]
    %v107 = vld [vmem:[#allocation4 + $0xc8] sm:$0xff]
    %v108 = vld [vmem:[#allocation4 + $0xd0] sm:$0xff]
    %v109 = vld [vmem:[#allocation4 + $0xd8] sm:$0xff]
    %v110 = vld [vmem:[#allocation4 + $0xe0] sm:$0xff]
    %v111 = vld [vmem:[#allocation4 + $0xe8] sm:$0xff]
    %v112 = vld [vmem:[#allocation4 + $0xf0] sm:$0xff]
    %v113 = vld [vmem:[#allocation4 + $0xf8] sm:$0xff]
    %v114 = vld [vmem:[#allocation4 + $0x100] sm:$0xff]
    %v115 = vld [vmem:[#allocation4 + $0x108] sm:$0xff]
    %v116 = vld [vmem:[#allocation4 + $0x110] sm:$0xff]
    %v117 = vld [vmem:[#allocation4 + $0x118] sm:$0xff]
    %v118 = vld [vmem:[#allocation4 + $0x120] sm:$0xff]
    %v119 = vld [vmem:[#allocation4 + $0x128] sm:$0xff]
    %v120 = vld [vmem:[#allocation4 + $0x130] sm:$0xff]
    %v121 = vld [vmem:[#allocation4 + $0x138] sm:$0xff]
    %v122 = vld [vmem:[#allocation4 + $0x140] sm:$0xff]
    %v123 = vld [vmem:[#allocation4 + $0x148] sm:$0xff]
    %v124 = vld [vmem:[#allocation4 + $0x150] sm:$0xff]
    %v125 = vld [vmem:[#allocation4 + $0x158] sm:$0xff]
    %v126 = vld [vmem:[#allocation4 + $0x160] sm:$0xff]
    %v127 = vld [vmem:[#allocation4 + $0x168] sm:$0xff]
    %v128 = vld [vmem:[#allocation4 + $0x170] sm:$0xff]
    %v129 = vld [vmem:[#allocation4 + $0x178] sm:$0xff]
    %v130 = vld [vmem:[#allocation4 + $0x180] sm:$0xff]
    %v131 = vld [vmem:[#allocation4 + $0x188] sm:$0xff]
    %v132 = vld [vmem:[#allocation4 + $0x190] sm:$0xff]
    %v133 = vld [vmem:[#allocation4 + $0x198] sm:$0xff]
    %v134 = vld [vmem:[#allocation4 + $0x1a0] sm:$0xff]
    %v135 = vld [vmem:[#allocation4 + $0x1a8] sm:$0xff]
    %v136 = vld [vmem:[#allocation4 + $0x1b0] sm:$0xff]
    %v137 = vld [vmem:[#allocation4 + $0x1b8] sm:$0xff]
    %v138 = vld [vmem:[#allocation4 + $0x1c0] sm:$0xff]
    %v139 = vld [vmem:[#allocation4 + $0x1c8] sm:$0xff]
    %v140 = vld [vmem:[#allocation4 + $0x1d0] sm:$0xff]
    %v141 = vld [vmem:[#allocation4 + $0x1d8] sm:$0xff]
    %v142 = vld [vmem:[#allocation4 + $0x1e0] sm:$0xff]
    %v143 = vld [vmem:[#allocation4 + $0x1e8] sm:$0xff]
    %v144 = vld [vmem:[#allocation4 + $0x1f0] sm:$0xff]
    %v145 = vld [vmem:[#allocation4 + $0x1f8] sm:$0xff]
    %v146 = vld [vmem:[#allocation2] sm:$0xff]
    %v147 = vld [vmem:[#allocation6] sm:$0xff]
    %v148 = vld [vmem:[#allocation6 + $0x8] sm:$0xff]
    %v149 = vld [vmem:[#allocation6 + $0x10] sm:$0xff]
    %v150 = vld [vmem:[#allocation6 + $0x18] sm:$0xff]
    %v151 = vld [vmem:[#allocation6 + $0x20] sm:$0xff]
    %v152 = vld [vmem:[#allocation6 + $0x28] sm:$0xff]
    %v153 = vld [vmem:[#allocation6 + $0x30] sm:$0xff]
    %v154 = vld [vmem:[#allocation6 + $0x38] sm:$0xff]
    %v155 = vld [vmem:[#allocation6 + $0x40] sm:$0xff]
    %v156 = vld [vmem:[#allocation6 + $0x48] sm:$0xff]
    %v157 = vld [vmem:[#allocation6 + $0x50] sm:$0xff]
    %v158 = vld [vmem:[#allocation6 + $0x58] sm:$0xff]
    %v159 = vld [vmem:[#allocation6 + $0x60] sm:$0xff]
    %v160 = vld [vmem:[#allocation6 + $0x68] sm:$0xff]
    %v161 = vld [vmem:[#allocation6 + $0x70] sm:$0xff]
    %v162 = vld [vmem:[#allocation6 + $0x78] sm:$0xff]
    %v163 = vld [vmem:[#allocation6 + $0x80] sm:$0xff]
    %v164 = vld [vmem:[#allocation6 + $0x88] sm:$0xff]
    %v165 = vld [vmem:[#allocation6 + $0x90] sm:$0xff]
    %v166 = vld [vmem:[#allocation6 + $0x98] sm:$0xff]
    %v167 = vld [vmem:[#allocation6 + $0xa0] sm:$0xff]
    %v168 = vld [vmem:[#allocation6 + $0xa8] sm:$0xff]
    %v169 = vld [vmem:[#allocation6 + $0xb0] sm:$0xff]
    %v170 = vld [vmem:[#allocation6 + $0xb8] sm:$0xff]
    %v171 = vld [vmem:[#allocation6 + $0xc0] sm:$0xff]
    %v172 = vld [vmem:[#allocation6 + $0xc8] sm:$0xff]
    %v173 = vld [vmem:[#allocation6 + $0xd0] sm:$0xff]
    %v174 = vld [vmem:[#allocation6 + $0xd8] sm:$0xff]
    %v175 = vld [vmem:[#allocation6 + $0xe0] sm:$0xff]
    %v176 = vld [vmem:[#allocation6 + $0xe8] sm:$0xff]
    %v177 = vld [vmem:[#allocation6 + $0xf0] sm:$0xff]
    %v178 = vld [vmem:[#allocation6 + $0xf8] sm:$0xff]
    %v179 = vld [vmem:[#allocation6 + $0x100] sm:$0xff]
    %v180 = vld [vmem:[#allocation6 + $0x108] sm:$0xff]
    %v181 = vld [vmem:[#allocation6 + $0x110] sm:$0xff]
    %v182 = vld [vmem:[#allocation6 + $0x118] sm:$0xff]
    %v183 = vld [vmem:[#allocation6 + $0x120] sm:$0xff]
    %v184 = vld [vmem:[#allocation6 + $0x128] sm:$0xff]
    %v185 = vld [vmem:[#allocation6 + $0x130] sm:$0xff]
    %v186 = vld [vmem:[#allocation6 + $0x138] sm:$0xff]
    %v187 = vld [vmem:[#allocation6 + $0x140] sm:$0xff]
    %v188 = vld [vmem:[#allocation6 + $0x148] sm:$0xff]
    %v189 = vld [vmem:[#allocation6 + $0x150] sm:$0xff]
    %v190 = vld [vmem:[#allocation6 + $0x158] sm:$0xff]
    %v191 = vld [vmem:[#allocation6 + $0x160] sm:$0xff]
    %v192 = vld [vmem:[#allocation6 + $0x168] sm:$0xff]
    %v193 = vld [vmem:[#allocation6 + $0x170] sm:$0xff]
    %v194 = vld [vmem:[#allocation6 + $0x178] sm:$0xff]
    %v195 = vld [vmem:[#allocation6 + $0x180] sm:$0xff]
    %v196 = vld [vmem:[#allocation6 + $0x188] sm:$0xff]
    %v197 = vld [vmem:[#allocation6 + $0x190] sm:$0xff]
    %v198 = vld [vmem:[#allocation6 + $0x198] sm:$0xff]
    %v199 = vld [vmem:[#allocation6 + $0x1a0] sm:$0xff]
    %v200 = vld [vmem:[#allocation6 + $0x1a8] sm:$0xff]
    %v201 = vld [vmem:[#allocation6 + $0x1b0] sm:$0xff]
    %v202 = vld [vmem:[#allocation6 + $0x1b8] sm:$0xff]
    %v203 = vld [vmem:[#allocation6 + $0x1c0] sm:$0xff]
    %v204 = vld [vmem:[#allocation6 + $0x1c8] sm:$0xff]
    %v205 = vld [vmem:[#allocation6 + $0x1d0] sm:$0xff]
    %v206 = vld [vmem:[#allocation6 + $0x1d8] sm:$0xff]
    %v207 = vld [vmem:[#allocation6 + $0x1e0] sm:$0xff]
    %v208 = vld [vmem:[#allocation6 + $0x1e8] sm:$0xff]
    %v209 = vld [vmem:[#allocation6 + $0x1f0] sm:$0xff]
    %v210 = vld [vmem:[#allocation6 + $0x1f8] sm:$0xff]
    %211 = vmatprep.subr.mxu0 %v148
    %212 = vmatpush1.msra.mxu0 %v147
    %213 = vmatprep.subr.mxu0 %v152
    %214 = vmatpush1.msra.mxu0 %v151
    %215 = vmatprep.subr.mxu0 %v156
    %216 = vmatpush1.msra.mxu0 %v155
    %217 = vmatprep.subr.mxu0 %v160
    %218 = vmatpush1.msra.mxu0 %v159
    %219 = vmatprep.subr.mxu0 %v164
    %220 = vmatpush1.msra.mxu0 %v163
    %221 = vmatprep.subr.mxu0 %v168
    %222 = vmatpush1.msra.mxu0 %v167
    %223 = vmatprep.subr.mxu0 %v172
    %224 = vmatpush1.msra.mxu0 %v171
    %225 = vmatprep.subr.mxu0 %v176
    %226 = vmatpush1.msra.mxu0 %v175
    %227 = vmatprep.subr.mxu0 %v180
    %228 = vmatpush1.msra.mxu0 %v179
    %229 = vmatprep.subr.mxu0 %v184
    %230 = vmatpush1.msra.mxu0 %v183
    %231 = vmatprep.subr.mxu0 %v188
    %232 = vmatpush1.msra.mxu0 %v187
    %233 = vmatprep.subr.mxu0 %v192
    %234 = vmatpush1.msra.mxu0 %v191
    %235 = vmatprep.subr.mxu0 %v196
    %236 = vmatpush1.msra.mxu0 %v195
    %237 = vmatprep.subr.mxu0 %v200
    %238 = vmatpush1.msra.mxu0 %v199
    %239 = vmatprep.subr.mxu0 %v204
    %240 = vmatpush1.msra.mxu0 %v203
    %241 = vmatprep.subr.mxu0 %v208
    %242 = vmatpush1.msra.mxu0 %v207
    %243 = vmatprep.subr.mxu0 0.0
    %244 = vmatpush1.msra.mxu0 0.0
    %245 = vmatprep.subr.mxu0 0.0
    %246 = vmatpush1.msra.mxu0 0.0
    %247 = vmatprep.subr.mxu0 0.0
    %248 = vmatpush1.msra.mxu0 0.0
    %249 = vmatprep.subr.mxu0 0.0
    %250 = vmatpush1.msra.mxu0 0.0
    %251 = vmatprep.subr.mxu0 0.0
    %252 = vmatpush1.msra.mxu0 0.0
    %253 = vmatprep.subr.mxu0 0.0
    %254 = vmatpush1.msra.mxu0 0.0
    %255 = vmatprep.subr.mxu0 0.0
    %256 = vmatpush1.msra.mxu0 0.0
    %257 = vmatprep.subr.mxu0 0.0
    %258 = vmatpush1.msra.mxu0 0.0
    %259 = vmatprep.subr.mxu0 0.0
    %260 = vmatpush1.msra.mxu0 0.0
    %261 = vmatprep.subr.mxu0 0.0
    %262 = vmatpush1.msra.mxu0 0.0
    %263 = vmatprep.subr.mxu0 0.0
    %264 = vmatpush1.msra.mxu0 0.0
    %265 = vmatprep.subr.mxu0 0.0
    %266 = vmatpush1.msra.mxu0 0.0
    %267 = vmatprep.subr.mxu0 0.0
    %268 = vmatpush1.msra.mxu0 0.0
    %269 = vmatprep.subr.mxu0 0.0
    %270 = vmatpush1.msra.mxu0 0.0
    %271 = vmatprep.subr.mxu0 0.0
    %272 = vmatpush1.msra.mxu0 0.0
    %273 = vmatprep.subr.mxu0 0.0
    %274 = vmatpush1.msra.mxu0 0.0
    %275 = vmatprep.mubr.f32.mxu0 0.0
    %276 = vmatmul.mubr.f32.gmra.mrb[0].mxu0 %v146
    %v277 = vpop.f32.mrb[0].mxu0
    %v278 = vadd.f32 0.0, %v277
    %v279 = vpop.f32.mrb[0].mxu0
    %v280 = vadd.f32 0.0, %v279
    %281 = vdwg.mxu0
    %282 = vmatprep.subr.mxu0 %v150
    %283 = vmatpush1.msra.mxu0 %v149
    %284 = vmatprep.subr.mxu0 %v154
    %285 = vmatpush1.msra.mxu0 %v153
    %286 = vmatprep.subr.mxu0 %v158
    %287 = vmatpush1.msra.mxu0 %v157
    %288 = vmatprep.subr.mxu0 %v162
    %289 = vmatpush1.msra.mxu0 %v161
    %290 = vmatprep.subr.mxu0 %v166
    %291 = vmatpush1.msra.mxu0 %v165
    %292 = vmatprep.subr.mxu0 %v170
    %293 = vmatpush1.msra.mxu0 %v169
    %294 = vmatprep.subr.mxu0 %v174
    %295 = vmatpush1.msra.mxu0 %v173
    %296 = vmatprep.subr.mxu0 %v178
    %297 = vmatpush1.msra.mxu0 %v177
    %298 = vmatprep.subr.mxu0 %v182
    %299 = vmatpush1.msra.mxu0 %v181
    %300 = vmatprep.subr.mxu0 %v186
    %301 = vmatpush1.msra.mxu0 %v185
    %302 = vmatprep.subr.mxu0 %v190
    %303 = vmatpush1.msra.mxu0 %v189
    %304 = vmatprep.subr.mxu0 %v194
    %305 = vmatpush1.msra.mxu0 %v193
    %306 = vmatprep.subr.mxu0 %v198
    %307 = vmatpush1.msra.mxu0 %v197
    %308 = vmatprep.subr.mxu0 %v202
    %309 = vmatpush1.msra.mxu0 %v201
    %310 = vmatprep.subr.mxu0 %v206
    %311 = vmatpush1.msra.mxu0 %v205
    %312 = vmatprep.subr.mxu0 %v210
    %313 = vmatpush1.msra.mxu0 %v209
    %314 = vmatprep.subr.mxu0 0.0
    %315 = vmatpush1.msra.mxu0 0.0
    %316 = vmatprep.subr.mxu0 0.0
    %317 = vmatpush1.msra.mxu0 0.0
    %318 = vmatprep.subr.mxu0 0.0
    %319 = vmatpush1.msra.mxu0 0.0
    %320 = vmatprep.subr.mxu0 0.0
    %321 = vmatpush1.msra.mxu0 0.0
    %322 = vmatprep.subr.mxu0 0.0
    %323 = vmatpush1.msra.mxu0 0.0
    %324 = vmatprep.subr.mxu0 0.0
    %325 = vmatpush1.msra.mxu0 0.0
    %326 = vmatprep.subr.mxu0 0.0
    %327 = vmatpush1.msra.mxu0 0.0
    %328 = vmatprep.subr.mxu0 0.0
    %329 = vmatpush1.msra.mxu0 0.0
    %330 = vmatprep.subr.mxu0 0.0
    %331 = vmatpush1.msra.mxu0 0.0
    %332 = vmatprep.subr.mxu0 0.0
    %333 = vmatpush1.msra.mxu0 0.0
    %334 = vmatprep.subr.mxu0 0.0
    %335 = vmatpush1.msra.mxu0 0.0
    %336 = vmatprep.subr.mxu0 0.0
    %337 = vmatpush1.msra.mxu0 0.0
    %338 = vmatprep.subr.mxu0 0.0
    %339 = vmatpush1.msra.mxu0 0.0
    %340 = vmatprep.subr.mxu0 0.0
    %341 = vmatpush1.msra.mxu0 0.0
    %342 = vmatprep.subr.mxu0 0.0
    %343 = vmatpush1.msra.mxu0 0.0
    %344 = vmatprep.subr.mxu0 0.0
    %345 = vmatpush1.msra.mxu0 0.0
    %346 = vmatprep.mubr.f32.mxu0 0.0
    %347 = vmatmul.mubr.f32.gmra.mrb[0].mxu0 %v146
    %v348 = vpop.f32.mrb[0].mxu0
    %v349 = vadd.f32 0.0, %v348
    %v350 = vpop.f32.mrb[0].mxu0
    %v351 = vadd.f32 0.0, %v350
    %352 = vdwg.mxu0
    %353 = vmatprep.subr.mxu0 %v83
    %354 = vmatpush1.msra.mxu0 %v82
    %355 = vmatprep.subr.mxu0 %v87
    %356 = vmatpush1.msra.mxu0 %v86
    %357 = vmatprep.subr.mxu0 %v91
    %358 = vmatpush1.msra.mxu0 %v90
    %359 = vmatprep.subr.mxu0 %v95
    %360 = vmatpush1.msra.mxu0 %v94
    %361 = vmatprep.subr.mxu0 %v99
    %362 = vmatpush1.msra.mxu0 %v98
    %363 = vmatprep.subr.mxu0 %v103
    %364 = vmatpush1.msra.mxu0 %v102
    %365 = vmatprep.subr.mxu0 %v107
    %366 = vmatpush1.msra.mxu0 %v106
    %367 = vmatprep.subr.mxu0 %v111
    %368 = vmatpush1.msra.mxu0 %v110
    %369 = vmatprep.subr.mxu0 %v115
    %370 = vmatpush1.msra.mxu0 %v114
    %371 = vmatprep.subr.mxu0 %v119
    %372 = vmatpush1.msra.mxu0 %v118
    %373 = vmatprep.subr.mxu0 %v123
    %374 = vmatpush1.msra.mxu0 %v122
    %375 = vmatprep.subr.mxu0 %v127
    %376 = vmatpush1.msra.mxu0 %v126
    %377 = vmatprep.subr.mxu0 %v131
    %378 = vmatpush1.msra.mxu0 %v130
    %379 = vmatprep.subr.mxu0 %v135
    %380 = vmatpush1.msra.mxu0 %v134
    %381 = vmatprep.subr.mxu0 %v139
    %382 = vmatpush1.msra.mxu0 %v138
    %383 = vmatprep.subr.mxu0 %v143
    %384 = vmatpush1.msra.mxu0 %v142
    %385 = vmatprep.subr.mxu0 0.0
    %386 = vmatpush1.msra.mxu0 0.0
    %387 = vmatprep.subr.mxu0 0.0
    %388 = vmatpush1.msra.mxu0 0.0
    %389 = vmatprep.subr.mxu0 0.0
    %390 = vmatpush1.msra.mxu0 0.0
    %391 = vmatprep.subr.mxu0 0.0
    %392 = vmatpush1.msra.mxu0 0.0
    %393 = vmatprep.subr.mxu0 0.0
    %394 = vmatpush1.msra.mxu0 0.0
    %395 = vmatprep.subr.mxu0 0.0
    %396 = vmatpush1.msra.mxu0 0.0
    %397 = vmatprep.subr.mxu0 0.0
    %398 = vmatpush1.msra.mxu0 0.0
    %399 = vmatprep.subr.mxu0 0.0
    %400 = vmatpush1.msra.mxu0 0.0
    %401 = vmatprep.subr.mxu0 0.0
    %402 = vmatpush1.msra.mxu0 0.0
    %403 = vmatprep.subr.mxu0 0.0
    %404 = vmatpush1.msra.mxu0 0.0
    %405 = vmatprep.subr.mxu0 0.0
    %406 = vmatpush1.msra.mxu0 0.0
    %407 = vmatprep.subr.mxu0 0.0
    %408 = vmatpush1.msra.mxu0 0.0
    %409 = vmatprep.subr.mxu0 0.0
    %410 = vmatpush1.msra.mxu0 0.0
    %411 = vmatprep.subr.mxu0 0.0
    %412 = vmatpush1.msra.mxu0 0.0
    %413 = vmatprep.subr.mxu0 0.0
    %414 = vmatpush1.msra.mxu0 0.0
    %415 = vmatprep.subr.mxu0 0.0
    %416 = vmatpush1.msra.mxu0 0.0
    %417 = vmatprep.mubr.f32.mxu0 0.0
    %418 = vmatmul.mubr.f32.gmra.mrb[0].mxu0 %v81
    %v419 = vpop.f32.mrb[0].mxu0
    %v420 = vadd.f32 %v278, %v419
    %v421 = vpop.f32.mrb[0].mxu0
    %v422 = vadd.f32 %v280, %v421
    %423 = vdwg.mxu0
    %424 = vmatprep.subr.mxu0 %v85
    %425 = vmatpush1.msra.mxu0 %v84
    %426 = vmatprep.subr.mxu0 %v89
    %427 = vmatpush1.msra.mxu0 %v88
    %428 = vmatprep.subr.mxu0 %v93
    %429 = vmatpush1.msra.mxu0 %v92
    %430 = vmatprep.subr.mxu0 %v97
    %431 = vmatpush1.msra.mxu0 %v96
    %432 = vmatprep.subr.mxu0 %v101
    %433 = vmatpush1.msra.mxu0 %v100
    %434 = vmatprep.subr.mxu0 %v105
    %435 = vmatpush1.msra.mxu0 %v104
    %436 = vmatprep.subr.mxu0 %v109
    %437 = vmatpush1.msra.mxu0 %v108
    %438 = vmatprep.subr.mxu0 %v113
    %439 = vmatpush1.msra.mxu0 %v112
    %440 = vmatprep.subr.mxu0 %v117
    %441 = vmatpush1.msra.mxu0 %v116
    %442 = vmatprep.subr.mxu0 %v121
    %443 = vmatpush1.msra.mxu0 %v120
    %444 = vmatprep.subr.mxu0 %v125
    %445 = vmatpush1.msra.mxu0 %v124
    %446 = vmatprep.subr.mxu0 %v129
    %447 = vmatpush1.msra.mxu0 %v128
    %448 = vmatprep.subr.mxu0 %v133
    %449 = vmatpush1.msra.mxu0 %v132
    %450 = vmatprep.subr.mxu0 %v137
    %451 = vmatpush1.msra.mxu0 %v136
    %452 = vmatprep.subr.mxu0 %v141
    %453 = vmatpush1.msra.mxu0 %v140
    %454 = vmatprep.subr.mxu0 %v145
    %455 = vmatpush1.msra.mxu0 %v144
    %456 = vmatprep.subr.mxu0 0.0
    %457 = vmatpush1.msra.mxu0 0.0
    %458 = vmatprep.subr.mxu0 0.0
    %459 = vmatpush1.msra.mxu0 0.0
    %460 = vmatprep.subr.mxu0 0.0
    %461 = vmatpush1.msra.mxu0 0.0
    %462 = vmatprep.subr.mxu0 0.0
    %463 = vmatpush1.msra.mxu0 0.0
    %464 = vmatprep.subr.mxu0 0.0
    %465 = vmatpush1.msra.mxu0 0.0
    %466 = vmatprep.subr.mxu0 0.0
    %467 = vmatpush1.msra.mxu0 0.0
    %468 = vmatprep.subr.mxu0 0.0
    %469 = vmatpush1.msra.mxu0 0.0
    %470 = vmatprep.subr.mxu0 0.0
    %471 = vmatpush1.msra.mxu0 0.0
    %472 = vmatprep.subr.mxu0 0.0
    %473 = vmatpush1.msra.mxu0 0.0
    %474 = vmatprep.subr.mxu0 0.0
    %475 = vmatpush1.msra.mxu0 0.0
    %476 = vmatprep.subr.mxu0 0.0
    %477 = vmatpush1.msra.mxu0 0.0
    %478 = vmatprep.subr.mxu0 0.0
    %479 = vmatpush1.msra.mxu0 0.0
    %480 = vmatprep.subr.mxu0 0.0
    %481 = vmatpush1.msra.mxu0 0.0
    %482 = vmatprep.subr.mxu0 0.0
    %483 = vmatpush1.msra.mxu0 0.0
    %484 = vmatprep.subr.mxu0 0.0
    %485 = vmatpush1.msra.mxu0 0.0
    %486 = vmatprep.subr.mxu0 0.0
    %487 = vmatpush1.msra.mxu0 0.0
    %488 = vmatprep.mubr.f32.mxu0 0.0
    %489 = vmatmul.mubr.f32.gmra.mrb[0].mxu0 %v81
    %v490 = vpop.f32.mrb[0].mxu0
    %v491 = vadd.f32 %v349, %v490
    %v492 = vpop.f32.mrb[0].mxu0
    %v493 = vadd.f32 %v351, %v492
    %494 = vdwg.mxu0
    %v495 = vld [vmem:[%s5] sm:$0xf]
    %v497 = vlaneseq
    %v498 = vshrl.u32 %v497, 7
    %v499 = vsub.s32 0, %v498
    %v500 = vrot.slane %v495, %v499
    %v501 = vlaneseq
    %v502 = vshrl.u32 %v501, 7
    %v503 = vsub.s32 1, %v502
    %v504 = vrot.slane %v495, %v503
    %v505 = vlaneseq
    %v506 = vshrl.u32 %v505, 7
    %v507 = vsub.s32 2, %v506
    %v508 = vrot.slane %v495, %v507
    %v509 = vlaneseq
    %v510 = vshrl.u32 %v509, 7
    %v511 = vsub.s32 3, %v510
    %v512 = vrot.slane %v495, %v511
    %v517 = vadd.f32 %v420, %v500
    %v518 = vadd.f32 %v422, %v504
    %v519 = vadd.f32 %v491, %v508
    %v520 = vadd.f32 %v493, %v512
    %v521 = vxor.u32 %v517, 2147483648
    %v522 = vxor.u32 %v518, 2147483648
    %v523 = vxor.u32 %v519, 2147483648
    %v524 = vmul.f32 %v521, 1.442695
    %v525 = vpow.pop %v524
    %v526 = vmul.f32 %v522, 1.442695
    %v527 = vpow.pop %v526
    %v528 = vmul.f32 %v523, 1.442695
    %v529 = vpow.pop %v528
    %v530 = vadd.f32 %v525, 1.0
    %v531 = vadd.f32 %v527, 1.0
    %v532 = vadd.f32 %v529, 1.0
    %v533 = vrcp.pop %v530
    %v534 = vmul.f32 1.0, %v533
    %v535 = vrcp.pop %v531
    %v536 = vmul.f32 1.0, %v535
    %v537 = vrcp.pop %v532
    %v538 = vmul.f32 1.0, %v537
    %v539 = vtanh.pop %v520
    %v540 = vld [vmem:[#allocation3] sm:$0xff]
    %v541 = vmul.f32 %v536, %v540
    %v542 = vmul.f32 %v534, %v539
    %v543 = vadd.f32 %v541, %v542
    %v544 = vtanh.pop %v543
    %v545 = vmul.f32 %v538, %v544
    %546 = vst [vmem:[#allocation2] sm:$0xff] %v545
    %547 = vst [vmem:[#allocation3] sm:$0xff] %v543
    %v548 = vld [vmem:[#allocation8] sm:$0xff]
    %v549 = vld [vmem:[#allocation8 + $0x8] sm:$0xff]
    %v550 = vld [vmem:[#allocation8 + $0x10] sm:$0xff]
    %v551 = vld [vmem:[#allocation8 + $0x18] sm:$0xff]
    %v552 = vld [vmem:[#allocation8 + $0x20] sm:$0xff]
    %v553 = vld [vmem:[#allocation8 + $0x28] sm:$0xff]
    %v554 = vld [vmem:[#allocation8 + $0x30] sm:$0xff]
    %v555 = vld [vmem:[#allocation8 + $0x38] sm:$0xff]
    %v556 = vld [vmem:[#allocation8 + $0x40] sm:$0xff]
    %v557 = vld [vmem:[#allocation8 + $0x48] sm:$0xff]
    %v558 = vld [vmem:[#allocation8 + $0x50] sm:$0xff]
    %v559 = vld [vmem:[#allocation8 + $0x58] sm:$0xff]
    %v560 = vld [vmem:[#allocation8 + $0x60] sm:$0xff]
    %v561 = vld [vmem:[#allocation8 + $0x68] sm:$0xff]
    %v562 = vld [vmem:[#allocation8 + $0x70] sm:$0xff]
    %v563 = vld [vmem:[#allocation8 + $0x78] sm:$0xff]
    %v564 = vld [vmem:[%s7] sm:$0x1]
    %v566 = vlaneseq
    %v567 = vshrl.u32 %v566, 7
    %v568 = vsub.s32 0, %v567
    %v569 = vrot.slane %v564, %v568
    %571 = vmatprep.subr.mxu0 0.0
    %572 = vmatpush1.msra.mxu0 %v548
    %573 = vmatprep.subr.mxu0 0.0
    %574 = vmatpush1.msra.mxu0 %v549
    %575 = vmatprep.subr.mxu0 0.0
    %576 = vmatpush1.msra.mxu0 %v550
    %577 = vmatprep.subr.mxu0 0.0
    %578 = vmatpush1.msra.mxu0 %v551
    %579 = vmatprep.subr.mxu0 0.0
    %580 = vmatpush1.msra.mxu0 %v552
    %581 = vmatprep.subr.mxu0 0.0
    %582 = vmatpush1.msra.mxu0 %v553
    %583 = vmatprep.subr.mxu0 0.0
    %584 = vmatpush1.msra.mxu0 %v554
    %585 = vmatprep.subr.mxu0 0.0
    %586 = vmatpush1.msra.mxu0 %v555
    %587 = vmatprep.subr.mxu0 0.0
    %588 = vmatpush1.msra.mxu0 %v556
    %589 = vmatprep.subr.mxu0 0.0
    %590 = vmatpush1.msra.mxu0 %v557
    %591 = vmatprep.subr.mxu0 0.0
    %592 = vmatpush1.msra.mxu0 %v558
    %593 = vmatprep.subr.mxu0 0.0
    %594 = vmatpush1.msra.mxu0 %v559
    %595 = vmatprep.subr.mxu0 0.0
    %596 = vmatpush1.msra.mxu0 %v560
    %597 = vmatprep.subr.mxu0 0.0
    %598 = vmatpush1.msra.mxu0 %v561
    %599 = vmatprep.subr.mxu0 0.0
    %600 = vmatpush1.msra.mxu0 %v562
    %601 = vmatprep.subr.mxu0 0.0
    %602 = vmatpush1.msra.mxu0 %v563
    %603 = vmatprep.subr.mxu0 0.0
    %604 = vmatpush1.msra.mxu0 0.0
    %605 = vmatprep.subr.mxu0 0.0
    %606 = vmatpush1.msra.mxu0 0.0
    %607 = vmatprep.subr.mxu0 0.0
    %608 = vmatpush1.msra.mxu0 0.0
    %609 = vmatprep.subr.mxu0 0.0
    %610 = vmatpush1.msra.mxu0 0.0
    %611 = vmatprep.subr.mxu0 0.0
    %612 = vmatpush1.msra.mxu0 0.0
    %613 = vmatprep.subr.mxu0 0.0
    %614 = vmatpush1.msra.mxu0 0.0
    %615 = vmatprep.subr.mxu0 0.0
    %616 = vmatpush1.msra.mxu0 0.0
    %617 = vmatprep.subr.mxu0 0.0
    %618 = vmatpush1.msra.mxu0 0.0
    %619 = vmatprep.subr.mxu0 0.0
    %620 = vmatpush1.msra.mxu0 0.0
    %621 = vmatprep.subr.mxu0 0.0
    %622 = vmatpush1.msra.mxu0 0.0
    %623 = vmatprep.subr.mxu0 0.0
    %624 = vmatpush1.msra.mxu0 0.0
    %625 = vmatprep.subr.mxu0 0.0
    %626 = vmatpush1.msra.mxu0 0.0
    %627 = vmatprep.subr.mxu0 0.0
    %628 = vmatpush1.msra.mxu0 0.0
    %629 = vmatprep.subr.mxu0 0.0
    %630 = vmatpush1.msra.mxu0 0.0
    %631 = vmatprep.subr.mxu0 0.0
    %632 = vmatpush1.msra.mxu0 0.0
    %633 = vmatprep.subr.mxu0 0.0
    %634 = vmatpush1.msra.mxu0 0.0
    %635 = vmatprep.mubr.f32.mxu0 0.0
    %636 = vmatmul.mubr.f32.gmra.mrb[0].mxu0 %v545
    %v637 = vpop.f32.mrb[0].mxu0
    %v638 = vadd.f32 %v569, %v637
    %v639 = vpop.f32.mrb[0].mxu0
    %640 = vdwg.mxu0
    %641 = vmax.xlane.f32.xlu0 %v638
    %v642 = vpop.xlane.xlu0 %641
    %v643 = vsub.f32 %v638, %v642
    %v644 = vmul.f32 %v643, 1.442695
    %v645 = vpow.pop %v644
    %646 = vadd.xlane.f32.xlu0 %v645
    %v647 = vpop.xlane.xlu0 %646
    %v648 = vlog2.pop %v647
    %v649 = vmul.f32 %v648, 0.6931472
    %v650 = vsub.f32 %v643, %v649
    %651 = vst [vmem:[%s8] sm:$0xff] %v650
    // Predicated region
    $region50: #{lstm_sequence_forward.1} parent=1 // pred_check
      %p652 = pneg %p73
    $region51: #{lstm_sequence_forward.1} parent=1 // pred_check_branch
      %654 = sbr.rel (%p652) target = $region53
    $region52: #{lstm_sequence_forward.1} parent=1 // pred_region
      %655 = vst [vmem:[%s9] sm:$0xff] %v545
      %656 = vst [vmem:[%s10] sm:$0xff] %v543
    $region53: #{lstm_sequence_forward.1} parent=1 // pred_fallthru
      _
    // Predicated region
    $region54: #{lstm_sequence_forward.1} parent=1 // pred_check
      _
    $region55: #{lstm_sequence_forward.1} parent=1 // pred_check_branch
      %658 = sbr.rel (0) target = $region57
    $region56: #{lstm_sequence_forward.1} parent=1 // pred_region
      _
    $region57: #{lstm_sequence_forward.1} parent=1 // pred_fallthru
      _
    // Predicated region
    $region58: #{lstm_sequence_forward.1} parent=1 // pred_check
      _
    $region59: #{lstm_sequence_forward.1} parent=1 // pred_check_branch
      %660 = sbr.rel (0) target = $region61
    $region60: #{lstm_sequence_forward.1} parent=1 // pred_region
      _
    $region61: #{lstm_sequence_forward.1} parent=1 // pred_fallthru
      _
    // Predicated region
    $region62: #{lstm_sequence_forward.1} parent=1 // pred_check
      _
    $region63: #{lstm_sequence_forward.1} parent=1 // pred_check_branch
      %662 = sbr.rel (0) target = $region65
    $region64: #{lstm_sequence_forward.1} parent=1 // pred_region
      _
    $region65: #{lstm_sequence_forward.1} parent=1 // pred_fallthru
      _
    // Predicated region
    $region66: #{lstm_sequence_forward.1} parent=1 // pred_check
      _
    $region67: #{lstm_sequence_forward.1} parent=1 // pred_check_branch
      %664 = sbr.rel (0) target = $region69
    $region68: #{lstm_sequence_forward.1} parent=1 // pred_region
      _
    $region69: #{lstm_sequence_forward.1} parent=1 // pred_fallthru
      _
    // Predicated region
    $region70: #{lstm_sequence_forward.1} parent=1 // pred_check
      _
    $region71: #{lstm_sequence_forward.1} parent=1 // pred_check_branch
      %666 = sbr.rel (0) target = $region73
    $region72: #{lstm_sequence_forward.1} parent=1 // pred_region
      _
    $region73: #{lstm_sequence_forward.1} parent=1 // pred_fallthru
      _
    // Predicated region
    $region74: #{lstm_sequence_forward.1} parent=1 // pred_check
      _
    $region75: #{lstm_sequence_forward.1} parent=1 // pred_check_branch
      %668 = sbr.rel (0) target = $region77
    $region76: #{lstm_sequence_forward.1} parent=1 // pred_region
      _
    $region77: #{lstm_sequence_forward.1} parent=1 // pred_fallthru
      _
    %669 = vsyncpa [#allocation5], 1
    %670 = vsyncpa [#allocation7], 1

</llo_original>
